<compile_context>
chip_gen: v7x
topology: tpu7x:2x2x1
jax: 0.10.0
libtpu: 0.0.40
codegen_flags: <defaults>
</compile_context>

<pallas_src>
import math

import jax
import jax.numpy as jnp
from jax.experimental import pallas as pl
from jax.experimental.pallas import tpu as pltpu


def _fft_l1_kernel(fhr_ref, fhi_ref, bwr_ref, bwi_ref, p_ref, t_ref, out_ref):
    """One grid step: sum |FFT2(p - t)| (real + imag) over a batch of B slabs.

    p_ref/t_ref : (H, B*W) — column b*W + w of row h is element (h, w) of slab b.
    fh*_ref     : (H, H) real/imag row-DFT matrices.
    bw*_ref     : (B*W, B*W) block-diagonal (I_B ⊗ F_W) real/imag column-DFT.
    out_ref     : (1, 1, 128) per-block partial sum, scalar broadcast across
                  lanes so the store is an unmasked lane-dense vst.
    """
    # FFT is linear: FFT2(p) - FFT2(t) == FFT2(p - t).  Single pipeline.
    d = p_ref[...].astype(jnp.float32) - t_ref[...].astype(jnp.float32)

    # Row-direction FFT (over H):  F_H @ d   (d is real).
    ar = jnp.dot(fhr_ref[...], d, preferred_element_type=jnp.float32)
    ai = jnp.dot(fhi_ref[...], d, preferred_element_type=jnp.float32)

    # Column-direction FFT (over W):  (ar + i*ai) @ (F_Wr + i*F_Wi),
    # applied per slab via the block-diagonal DFT matrices (lane-dense K=N=B*W).
    real = (jnp.dot(ar, bwr_ref[...], preferred_element_type=jnp.float32)
            - jnp.dot(ai, bwi_ref[...], preferred_element_type=jnp.float32))
    imag = (jnp.dot(ar, bwi_ref[...], preferred_element_type=jnp.float32)
            + jnp.dot(ai, bwr_ref[...], preferred_element_type=jnp.float32))

    s = jnp.sum(jnp.abs(real)) + jnp.sum(jnp.abs(imag))
    out_ref[...] = jnp.full(out_ref.shape, s, dtype=out_ref.dtype)


def _dft_matrix(n):
    k = jnp.arange(n, dtype=jnp.float32)[:, None]
    m = jnp.arange(n, dtype=jnp.float32)[None, :]
    ang = -2.0 * jnp.pi * k * m / float(n)
    return jnp.cos(ang), jnp.sin(ang)


def _pick_batch(m, w):
    """Slabs per grid step: target ~256 lanes on the flattened B*W axis."""
    b = max(1, -(-256 // w))          # ceil(256 / w)
    if b >= m:
        return m                      # single block == full array: always legal
    # interior blocks need B*W to be a multiple of 128 (lane tiling rule)
    g = math.lcm(w, 128) // w
    b = -(-b // g) * g
    return m if b >= m else b


def fft_loss(pred, target, weight=None, loss_weight=1.0, reduction="mean"):
    """Pallas equivalent of FFTLoss.forward(pred, target)."""
    assert pred.shape == target.shape
    # TODO(synk): element-wise `weight` not supported (original default is None).
    assert weight is None
    if reduction not in ("mean", "sum"):
        # TODO(synk): reduction='none' needs a per-element (..., H, W, 2) output;
        # this kernel fuses the L1 reduction, so it is not emitted here.
        raise NotImplementedError("only 'mean'/'sum' reductions are supported")

    *lead, H, W = pred.shape
    M = 1
    for dsz in lead:
        M *= dsz

    B = _pick_batch(M, W)
    G = -(-M // B)                    # number of grid steps / partial sums
    Mp = G * B

    # Keep native dtype through the layout plumbing (halves HBM traffic for
    # bf16 inputs); cast to f32 inside VMEM in the kernel.
    p3 = pred.reshape(M, H, W)
    t3 = target.reshape(M, H, W)
    if Mp != M:
        # Zero padding: FFT2(0 - 0) == 0, contributes nothing to the L1 sum.
        p3 = jnp.pad(p3, ((0, Mp - M), (0, 0), (0, 0)))
        t3 = jnp.pad(t3, ((0, Mp - M), (0, 0), (0, 0)))
    # (Mp, H, W) -> (H, Mp*W): lane-dense layout for the MXU matmuls.
    p2 = jnp.transpose(p3, (1, 0, 2)).reshape(H, Mp * W)
    t2 = jnp.transpose(t3, (1, 0, 2)).reshape(H, Mp * W)

    fhr, fhi = _dft_matrix(H)
    fwr, fwi = _dft_matrix(W)
    eye_b = jnp.eye(B, dtype=jnp.float32)
    bwr = jnp.kron(eye_b, fwr)        # (B*W, B*W) block-diagonal column DFT
    bwi = jnp.kron(eye_b, fwi)

    BW = B * W
    partials = pl.pallas_call(
        _fft_l1_kernel,
        out_shape=jax.ShapeDtypeStruct((G, 1, 128), jnp.float32),
        grid_spec=pltpu.PrefetchScalarGridSpec(
            num_scalar_prefetch=0,
            grid=(G,),
            in_specs=[
                pl.BlockSpec((H, H), lambda m: (0, 0)),
                pl.BlockSpec((H, H), lambda m: (0, 0)),
                pl.BlockSpec((BW, BW), lambda m: (0, 0)),
                pl.BlockSpec((BW, BW), lambda m: (0, 0)),
                pl.BlockSpec((H, BW), lambda m: (0, m)),
                pl.BlockSpec((H, BW), lambda m: (0, m)),
            ],
            out_specs=pl.BlockSpec((1, 1, 128), lambda m: (m, 0, 0)),
        ),
        compiler_params=pltpu.CompilerParams(
            dimension_semantics=("parallel",)),
    )(fhr, fhi, bwr, bwi, p2, t2)

    total = jnp.sum(partials[:, 0, 0])
    if reduction == "mean":
        # torch stacks real/imag on a new last dim -> 2x the element count.
        total = total / jnp.float32(M * H * W * 2)
    return jnp.float32(loss_weight) * total


def _reference(pred, target, loss_weight=1.0):
    pf = jnp.fft.fft2(pred, axes=(-2, -1))
    tf = jnp.fft.fft2(target, axes=(-2, -1))
    pf2 = jnp.stack([pf.real, pf.imag], axis=-1)
    tf2 = jnp.stack([tf.real, tf.imag], axis=-1)
    return loss_weight * jnp.mean(jnp.abs(pf2 - tf2))


if __name__ == "__main__":
    key = jax.random.PRNGKey(0)
    k1, k2 = jax.random.split(key)
    N, C, H, W = 2, 4, 16, 16
    pred = jax.random.normal(k1, (N, C, H, W), dtype=jnp.float32)
    target = jax.random.normal(k2, (N, C, H, W), dtype=jnp.float32)

    loss = fft_loss(pred, target, loss_weight=1.0, reduction="mean")
    loss = jax.block_until_ready(loss)

    ref = jax.block_until_ready(_reference(pred, target, 1.0))
    assert jnp.allclose(loss, ref, rtol=1e-4, atol=1e-4), (loss, ref)
    print("KERNEL_OK")
</pallas_src>

<mosaic_0001>
module attributes {stable_mosaic.version = 11 : i64} {
  func.func @_fft_l1_kernel(%arg0: i32, %arg1: memref<16x16xf32, #tpu.memory_space<vmem>>, %arg2: memref<16x16xf32, #tpu.memory_space<vmem>>, %arg3: memref<128x128xf32, #tpu.memory_space<vmem>>, %arg4: memref<128x128xf32, #tpu.memory_space<vmem>>, %arg5: memref<16x128xf32, #tpu.memory_space<vmem>>, %arg6: memref<16x128xf32, #tpu.memory_space<vmem>>, %arg7: memref<1x1x128xf32, #tpu.memory_space<vmem>>) attributes {dimension_semantics = [#tpu.dimension_semantics<parallel>], iteration_bounds = array<i64: 1>, scalar_prefetch = 0 : i64, scratch_operands = 0 : i64, tpu.core_type = #tpu.core_type<tc>, window_params = [{pipeline_mode = #tpu.pipeline_mode<synchronous>, transform_indices = @transform_0, window_bounds = array<i64: 16, 16>}, {pipeline_mode = #tpu.pipeline_mode<synchronous>, transform_indices = @transform_1, window_bounds = array<i64: 16, 16>}, {pipeline_mode = #tpu.pipeline_mode<synchronous>, transform_indices = @transform_2, window_bounds = array<i64: 128, 128>}, {pipeline_mode = #tpu.pipeline_mode<synchronous>, transform_indices = @transform_3, window_bounds = array<i64: 128, 128>}, {transform_indices = @transform_4, window_bounds = array<i64: 16, 128>}, {transform_indices = @transform_5, window_bounds = array<i64: 16, 128>}, {transform_indices = @transform_6, window_bounds = array<i64: 1, 1, 128>}]} {
    %c0 = arith.constant 0 : index
    %c0_0 = arith.constant 0 : index
    %0 = vector.load %arg5[%c0, %c0_0] : memref<16x128xf32, #tpu.memory_space<vmem>>, vector<16x128xf32>
    %c0_1 = arith.constant 0 : index
    %c0_2 = arith.constant 0 : index
    %1 = vector.load %arg6[%c0_1, %c0_2] : memref<16x128xf32, #tpu.memory_space<vmem>>, vector<16x128xf32>
    %2 = arith.subf %0, %1 : vector<16x128xf32>
    %c0_3 = arith.constant 0 : index
    %c0_4 = arith.constant 0 : index
    %3 = vector.load %arg1[%c0_3, %c0_4] : memref<16x16xf32, #tpu.memory_space<vmem>>, vector<16x16xf32>
    %cst = arith.constant dense<0.000000e+00> : vector<16x128xf32>
    %4 = tpu.matmul %3, %2, %cst {dimension_numbers = #tpu.dot_dimension_numbers<[1], [0], [0], [1], [0, 0, 1, 1], [], []>} : vector<16x16xf32>, vector<16x128xf32>, vector<16x128xf32> -> vector<16x128xf32>
    %c0_5 = arith.constant 0 : index
    %c0_6 = arith.constant 0 : index
    %5 = vector.load %arg2[%c0_5, %c0_6] : memref<16x16xf32, #tpu.memory_space<vmem>>, vector<16x16xf32>
    %cst_7 = arith.constant dense<0.000000e+00> : vector<16x128xf32>
    %6 = tpu.matmul %5, %2, %cst_7 {dimension_numbers = #tpu.dot_dimension_numbers<[1], [0], [0], [1], [0, 0, 1, 1], [], []>} : vector<16x16xf32>, vector<16x128xf32>, vector<16x128xf32> -> vector<16x128xf32>
    %c0_8 = arith.constant 0 : index
    %c0_9 = arith.constant 0 : index
    %7 = vector.load %arg3[%c0_8, %c0_9] : memref<128x128xf32, #tpu.memory_space<vmem>>, vector<128x128xf32>
    %cst_10 = arith.constant dense<0.000000e+00> : vector<16x128xf32>
    %8 = tpu.matmul %4, %7, %cst_10 {dimension_numbers = #tpu.dot_dimension_numbers<[1], [0], [0], [1], [0, 0, 1, 1], [], []>} : vector<16x128xf32>, vector<128x128xf32>, vector<16x128xf32> -> vector<16x128xf32>
    %c0_11 = arith.constant 0 : index
    %c0_12 = arith.constant 0 : index
    %9 = vector.load %arg4[%c0_11, %c0_12] : memref<128x128xf32, #tpu.memory_space<vmem>>, vector<128x128xf32>
    %cst_13 = arith.constant dense<0.000000e+00> : vector<16x128xf32>
    %10 = tpu.matmul %6, %9, %cst_13 {dimension_numbers = #tpu.dot_dimension_numbers<[1], [0], [0], [1], [0, 0, 1, 1], [], []>} : vector<16x128xf32>, vector<128x128xf32>, vector<16x128xf32> -> vector<16x128xf32>
    %11 = arith.subf %8, %10 : vector<16x128xf32>
    %c0_14 = arith.constant 0 : index
    %c0_15 = arith.constant 0 : index
    %12 = vector.load %arg4[%c0_14, %c0_15] : memref<128x128xf32, #tpu.memory_space<vmem>>, vector<128x128xf32>
    %cst_16 = arith.constant dense<0.000000e+00> : vector<16x128xf32>
    %13 = tpu.matmul %4, %12, %cst_16 {dimension_numbers = #tpu.dot_dimension_numbers<[1], [0], [0], [1], [0, 0, 1, 1], [], []>} : vector<16x128xf32>, vector<128x128xf32>, vector<16x128xf32> -> vector<16x128xf32>
    %c0_17 = arith.constant 0 : index
    %c0_18 = arith.constant 0 : index
    %14 = vector.load %arg3[%c0_17, %c0_18] : memref<128x128xf32, #tpu.memory_space<vmem>>, vector<128x128xf32>
    %cst_19 = arith.constant dense<0.000000e+00> : vector<16x128xf32>
    %15 = tpu.matmul %6, %14, %cst_19 {dimension_numbers = #tpu.dot_dimension_numbers<[1], [0], [0], [1], [0, 0, 1, 1], [], []>} : vector<16x128xf32>, vector<128x128xf32>, vector<16x128xf32> -> vector<16x128xf32>
    %16 = arith.addf %13, %15 : vector<16x128xf32>
    %17 = math.absf %11 : vector<16x128xf32>
    %18 = vector.shape_cast %17 : vector<16x128xf32> to vector<1x16x128xf32>
    %cst_20 = arith.constant dense<0.000000e+00> : vector<1xf32>
    %19 = vector.multi_reduction <add>, %18, %cst_20 [1, 2] : vector<1x16x128xf32> to vector<1xf32>
    %20 = vector.shape_cast %19 : vector<1xf32> to vector<1x1x1xf32>
    %21 = vector.extract %20[0, 0, 0] : f32 from vector<1x1x1xf32>
    %22 = math.absf %16 : vector<16x128xf32>
    %23 = vector.shape_cast %22 : vector<16x128xf32> to vector<1x16x128xf32>
    %cst_21 = arith.constant dense<0.000000e+00> : vector<1xf32>
    %24 = vector.multi_reduction <add>, %23, %cst_21 [1, 2] : vector<1x16x128xf32> to vector<1xf32>
    %25 = vector.shape_cast %24 : vector<1xf32> to vector<1x1x1xf32>
    %26 = vector.extract %25[0, 0, 0] : f32 from vector<1x1x1xf32>
    %27 = arith.addf %21, %26 : f32
    %28 = vector.broadcast %27 : f32 to vector<1x1x128xf32>
    %c0_22 = arith.constant 0 : index
    %c0_23 = arith.constant 0 : index
    %c0_24 = arith.constant 0 : index
    %29 = vector.load %arg7[%c0_22, %c0_23, %c0_24] : memref<1x1x128xf32, #tpu.memory_space<vmem>>, vector<1x1x128xf32>
    tpu.vector_store %arg7[%c0_22, %c0_23, %c0_24], %28 {strides = array<i32>} : memref<1x1x128xf32, #tpu.memory_space<vmem>>, vector<1x1x128xf32>,
    return
  }
  func.func @transform_0(%arg0: i32) -> (i32, i32) {
    %c0_i32 = arith.constant 0 : i32
    %c0_i32_0 = arith.constant 0 : i32
    %c0_i32_1 = arith.constant 0 : i32
    return %c0_i32, %c0_i32_0 : i32, i32
  }
  func.func @transform_1(%arg0: i32) -> (i32, i32) {
    %c0_i32 = arith.constant 0 : i32
    %c0_i32_0 = arith.constant 0 : i32
    %c0_i32_1 = arith.constant 0 : i32
    return %c0_i32, %c0_i32_0 : i32, i32
  }
  func.func @transform_2(%arg0: i32) -> (i32, i32) {
    %c0_i32 = arith.constant 0 : i32
    %c0_i32_0 = arith.constant 0 : i32
    %c0_i32_1 = arith.constant 0 : i32
    return %c0_i32, %c0_i32_0 : i32, i32
  }
  func.func @transform_3(%arg0: i32) -> (i32, i32) {
    %c0_i32 = arith.constant 0 : i32
    %c0_i32_0 = arith.constant 0 : i32
    %c0_i32_1 = arith.constant 0 : i32
    return %c0_i32, %c0_i32_0 : i32, i32
  }
  func.func @transform_4(%arg0: i32) -> (i32, i32) {
    %c0_i32 = arith.constant 0 : i32
    %c0_i32_0 = arith.constant 0 : i32
    return %c0_i32, %arg0 : i32, i32
  }
  func.func @transform_5(%arg0: i32) -> (i32, i32) {
    %c0_i32 = arith.constant 0 : i32
    %c0_i32_0 = arith.constant 0 : i32
    return %c0_i32, %arg0 : i32, i32
  }
  func.func @transform_6(%arg0: i32) -> (i32, i32, i32) {
    %c0_i32 = arith.constant 0 : i32
    %c0_i32_0 = arith.constant 0 : i32
    %c0_i32_1 = arith.constant 0 : i32
    return %arg0, %c0_i32, %c0_i32_0 : i32, i32, i32
  }
}

</mosaic_0001>

<llo_original>
// kernel: tpu_custom_call.1
$region0: #{tpu_custom_call.1}
  #allocation0 [shape = 'u32[]', space=smem, size = 0x4, offset = 0x4, fixed_abs, tag = 'smem constant byte address 0x4 - core index']
  #allocation1 [shape = 'u32[144,128]{1,0:T(1,128)}', space=vmem, size = 0x12000, scoped, tag = 'internal scratch']
  %s0 = inlined_call_operand.hbm [shape: f32[16,16], index: 0, kind: input, shape index: {}]
  %s1 = inlined_call_operand.hbm [shape: f32[16,16], index: 1, kind: input, shape index: {}]
  %s2 = inlined_call_operand.hbm [shape: f32[128,128], index: 2, kind: input, shape index: {}]
  %s3 = inlined_call_operand.hbm [shape: f32[128,128], index: 3, kind: input, shape index: {}]
  %s4 = inlined_call_operand.hbm [shape: f32[16,128], index: 4, kind: input, shape index: {}]
  %s5 = inlined_call_operand.vmem [shape: f32[16,128], index: 5, kind: input, shape index: {}]
  %s6 = inlined_call_operand.hbm [shape: f32[1,1,128], index: 6, kind: output, shape index: {}]
  %s7 = sld [smem:[#allocation0]]
  $region54: #{tpu_custom_call.1} parent=0
    _
  %s9 = ssub.s32 1, %s7
  %s10 = scalar_select 0, %s9, %s7
  $region1: #{tpu_custom_call.1} parent=0
    #allocation2 [shape = 'u8[8192]{0}', space=vmem, size = 0x2000, scoped, tag = 'input window, operand 0, single buffered']
    #allocation3 [shape = 's32[1]{0}', space=sflag, size = 0x4, scoped, tag = 'scoped memory for tpu_custom_call.1']
    #allocation4 [shape = 's32[1]{0}', space=sflag, size = 0x4, scoped, tag = 'scoped memory for tpu_custom_call.1']
    #allocation5 [shape = 'u8[8192]{0}', space=vmem, size = 0x2000, scoped, tag = 'input window, operand 1, single buffered']
    #allocation6 [shape = 's32[1]{0}', space=sflag, size = 0x4, scoped, tag = 'scoped memory for tpu_custom_call.1']
    #allocation7 [shape = 'u8[65536]{0}', space=vmem, size = 0x10000, scoped, tag = 'input window, operand 2, single buffered']
    #allocation8 [shape = 'u8[65536]{0}', space=vmem, size = 0x10000, scoped, tag = 'input window, operand 3, single buffered']
    #allocation9 [shape = 's32[1]{0}', space=sflag, size = 0x4, scoped, tag = 'scoped memory for tpu_custom_call.1']
    #allocation10 [shape = 'u8[8192]{0}', space=vmem, size = 0x2000, scoped, tag = 'input window, operand 4, single buffered']
    #allocation11 [shape = 'u8[512]{0}', space=vmem, size = 0x400, scoped, tag = 'output window, operand 0, single buffered']
    %11 = vsyncpa [#allocation3], 0
    %12 = vsyncpa [#allocation6], 0
    %13 = vsyncpa [#allocation9], 0
    %14 = vsyncpa [#allocation4], 0
    // Predicated region
    $region2: #{tpu_custom_call.1} parent=1 // pred_check
      _
    $region3: #{tpu_custom_call.1} parent=1 // pred_check_branch
      %16 = sbr.rel (0) target = $region5
    $region4: #{tpu_custom_call.1} parent=1 // pred_region
      %s18 = ssub.s32 256, 256
      %19 = vsyncadd [#allocation3], %s18
      %s20 = sshll.u32 [#allocation2], 4
      %s21 = int_to_ptr.vmem [resolvable:$true] %s20
      %26 = dma.hbm_to_vmem [thread:$0]  %s0, 256, %s21, [#allocation3], 128, 128, 8
    $region5: #{tpu_custom_call.1} parent=1 // pred_fallthru
      _
    // Predicated region
    $region6: #{tpu_custom_call.1} parent=1 // pred_check
      _
    $region7: #{tpu_custom_call.1} parent=1 // pred_check_branch
      %28 = sbr.rel (0) target = $region9
    $region8: #{tpu_custom_call.1} parent=1 // pred_region
      %s30 = ssub.s32 256, 256
      %31 = vsyncadd [#allocation6], %s30
      %s32 = sshll.u32 [#allocation5], 4
      %s33 = int_to_ptr.vmem [resolvable:$true] %s32
      %38 = dma.hbm_to_vmem [thread:$0]  %s1, 256, %s33, [#allocation6], 128, 128, 8
    $region9: #{tpu_custom_call.1} parent=1 // pred_fallthru
      _
    // Predicated region
    $region10: #{tpu_custom_call.1} parent=1 // pred_check
      _
    $region11: #{tpu_custom_call.1} parent=1 // pred_check_branch
      %40 = sbr.rel (0) target = $region13
    $region12: #{tpu_custom_call.1} parent=1 // pred_region
      %s42 = ssub.s32 2048, 2048
      %43 = vsyncadd [#allocation6], %s42
      %s44 = sshll.u32 [#allocation7], 4
      %s45 = int_to_ptr.vmem [resolvable:$true] %s44
      %50 = dma.hbm_to_vmem [thread:$0]  %s2, 2048, %s45, [#allocation6], 128, 128, 8
    $region13: #{tpu_custom_call.1} parent=1 // pred_fallthru
      _
    // Predicated region
    $region14: #{tpu_custom_call.1} parent=1 // pred_check
      _
    $region15: #{tpu_custom_call.1} parent=1 // pred_check_branch
      %52 = sbr.rel (0) target = $region17
    $region16: #{tpu_custom_call.1} parent=1 // pred_region
      %s54 = ssub.s32 2048, 2048
      %55 = vsyncadd [#allocation9], %s54
      %s56 = sshll.u32 [#allocation8], 4
      %s57 = int_to_ptr.vmem [resolvable:$true] %s56
      %62 = dma.hbm_to_vmem [thread:$0]  %s3, 2048, %s57, [#allocation9], 128, 128, 8
    $region17: #{tpu_custom_call.1} parent=1 // pred_fallthru
      _
    // Predicated region
    $region18: #{tpu_custom_call.1} parent=1 // pred_check
      _
    $region19: #{tpu_custom_call.1} parent=1 // pred_check_branch
      %64 = sbr.rel (0) target = $region21
    $region20: #{tpu_custom_call.1} parent=1 // pred_region
      %s66 = ssub.s32 256, 256
      %67 = vsyncadd [#allocation9], %s66
      %s68 = sshll.u32 [#allocation10], 4
      %s69 = int_to_ptr.vmem [resolvable:$true] %s68
      %74 = dma.hbm_to_vmem [thread:$0]  %s4, 256, %s69, [#allocation9], 128, 128, 8
    $region21: #{tpu_custom_call.1} parent=1 // pred_fallthru
      _
    // Predicated region
    $region22: #{tpu_custom_call.1} parent=1 // pred_check
      _
    $region23: #{tpu_custom_call.1} parent=1 // pred_check_branch
      %76 = sbr.rel (0) target = $region25
    $region24: #{tpu_custom_call.1} parent=1 // pred_region
      _
    $region25: #{tpu_custom_call.1} parent=1 // pred_fallthru
      _
    // Predicated region
    $region26: #{tpu_custom_call.1} parent=1 // pred_check
      _
    $region27: #{tpu_custom_call.1} parent=1 // pred_check_branch
      %78 = sbr.rel (0) target = $region29
    $region28: #{tpu_custom_call.1} parent=1 // pred_region
      %79 = dma.done [#allocation3], 256
    $region29: #{tpu_custom_call.1} parent=1 // pred_fallthru
      _
    // Predicated region
    $region30: #{tpu_custom_call.1} parent=1 // pred_check
      _
    $region31: #{tpu_custom_call.1} parent=1 // pred_check_branch
      %81 = sbr.rel (0) target = $region33
    $region32: #{tpu_custom_call.1} parent=1 // pred_region
      %82 = dma.done [#allocation6], 256
    $region33: #{tpu_custom_call.1} parent=1 // pred_fallthru
      _
    // Predicated region
    $region34: #{tpu_custom_call.1} parent=1 // pred_check
      _
    $region35: #{tpu_custom_call.1} parent=1 // pred_check_branch
      %84 = sbr.rel (0) target = $region37
    $region36: #{tpu_custom_call.1} parent=1 // pred_region
      %85 = dma.done [#allocation6], 2048
    $region37: #{tpu_custom_call.1} parent=1 // pred_fallthru
      _
    // Predicated region
    $region38: #{tpu_custom_call.1} parent=1 // pred_check
      _
    $region39: #{tpu_custom_call.1} parent=1 // pred_check_branch
      %87 = sbr.rel (0) target = $region41
    $region40: #{tpu_custom_call.1} parent=1 // pred_region
      %88 = dma.done [#allocation9], 2048
    $region41: #{tpu_custom_call.1} parent=1 // pred_fallthru
      _
    // Predicated region
    $region42: #{tpu_custom_call.1} parent=1 // pred_check
      _
    $region43: #{tpu_custom_call.1} parent=1 // pred_check_branch
      %90 = sbr.rel (0) target = $region45
    $region44: #{tpu_custom_call.1} parent=1 // pred_region
      %91 = dma.done [#allocation9], 256
    $region45: #{tpu_custom_call.1} parent=1 // pred_fallthru
      _
    %v92 = vld [vmem:[#allocation10] sm:$0xff]
    %v93 = vld [vmem:[#allocation10 + $0x8] sm:$0xff]
    %v94 = vld [vmem:[%s5] sm:$0xff]
    %v95 = vld [vmem:[%s5 + $0x8] sm:$0xff]
    %v96 = vsub.f32 %v92, %v94
    %v97 = vsub.f32 %v93, %v95
    %v98 = vld [vmem:[#allocation2] sm:$0xff]
    %v99 = vld [vmem:[#allocation2 + $0x8] sm:$0xff]
    %vm100 = vcmask 130048
    %v102 = vsel %vm100, %v98, 0
    %v105 = vsel %vm100, %v99, 0
    %107 = vmatprep.subr.mxu0 0.0
    %108 = vmatpush1.msra.mxu0 %v96
    %109 = vmatprep.subr.mxu0 0.0
    %110 = vmatpush1.msra.mxu0 %v97
    %111 = vmatprep.subr.mxu0 0.0
    %112 = vmatpush1.msra.mxu0 0.0
    %113 = vmatprep.subr.mxu0 0.0
    %114 = vmatpush1.msra.mxu0 0.0
    %115 = vmatprep.subr.mxu0 0.0
    %116 = vmatpush1.msra.mxu0 0.0
    %117 = vmatprep.subr.mxu0 0.0
    %118 = vmatpush1.msra.mxu0 0.0
    %119 = vmatprep.subr.mxu0 0.0
    %120 = vmatpush1.msra.mxu0 0.0
    %121 = vmatprep.subr.mxu0 0.0
    %122 = vmatpush1.msra.mxu0 0.0
    %123 = vmatprep.subr.mxu0 0.0
    %124 = vmatpush1.msra.mxu0 0.0
    %125 = vmatprep.subr.mxu0 0.0
    %126 = vmatpush1.msra.mxu0 0.0
    %127 = vmatprep.subr.mxu0 0.0
    %128 = vmatpush1.msra.mxu0 0.0
    %129 = vmatprep.subr.mxu0 0.0
    %130 = vmatpush1.msra.mxu0 0.0
    %131 = vmatprep.subr.mxu0 0.0
    %132 = vmatpush1.msra.mxu0 0.0
    %133 = vmatprep.subr.mxu0 0.0
    %134 = vmatpush1.msra.mxu0 0.0
    %135 = vmatprep.subr.mxu0 0.0
    %136 = vmatpush1.msra.mxu0 0.0
    %137 = vmatprep.subr.mxu0 0.0
    %138 = vmatpush1.msra.mxu0 0.0
    %139 = vmatprep.subr.mxu0 0.0
    %140 = vmatpush1.msra.mxu0 0.0
    %141 = vmatprep.subr.mxu0 0.0
    %142 = vmatpush1.msra.mxu0 0.0
    %143 = vmatprep.subr.mxu0 0.0
    %144 = vmatpush1.msra.mxu0 0.0
    %145 = vmatprep.subr.mxu0 0.0
    %146 = vmatpush1.msra.mxu0 0.0
    %147 = vmatprep.subr.mxu0 0.0
    %148 = vmatpush1.msra.mxu0 0.0
    %149 = vmatprep.subr.mxu0 0.0
    %150 = vmatpush1.msra.mxu0 0.0
    %151 = vmatprep.subr.mxu0 0.0
    %152 = vmatpush1.msra.mxu0 0.0
    %153 = vmatprep.subr.mxu0 0.0
    %154 = vmatpush1.msra.mxu0 0.0
    %155 = vmatprep.subr.mxu0 0.0
    %156 = vmatpush1.msra.mxu0 0.0
    %157 = vmatprep.subr.mxu0 0.0
    %158 = vmatpush1.msra.mxu0 0.0
    %159 = vmatprep.subr.mxu0 0.0
    %160 = vmatpush1.msra.mxu0 0.0
    %161 = vmatprep.subr.mxu0 0.0
    %162 = vmatpush1.msra.mxu0 0.0
    %163 = vmatprep.subr.mxu0 0.0
    %164 = vmatpush1.msra.mxu0 0.0
    %165 = vmatprep.subr.mxu0 0.0
    %166 = vmatpush1.msra.mxu0 0.0
    %167 = vmatprep.subr.mxu0 0.0
    %168 = vmatpush1.msra.mxu0 0.0
    %169 = vmatprep.subr.mxu0 0.0
    %170 = vmatpush1.msra.mxu0 0.0
    %171 = vmatprep.mubr.f32.mxu0 0.0
    %172 = vmatmul.mubr.f32.gmra.mrb[0].mxu0 %v102
    %v173 = vpop.f32.mrb[0].mxu0
    %v174 = vadd.f32 0.0, %v173
    %v175 = vpop.f32.mrb[0].mxu0
    %176 = vmatprep.mubr.f32.mxu0 0.0
    %177 = vmatmul.mubr.f32.gmra.mrb[0].mxu0 %v105
    %v178 = vpop.f32.mrb[0].mxu0
    %v179 = vadd.f32 0.0, %v178
    %v180 = vpop.f32.mrb[0].mxu0
    %181 = vdwg.mxu0
    %v182 = vld [vmem:[#allocation5] sm:$0xff]
    %v183 = vld [vmem:[#allocation5 + $0x8] sm:$0xff]
    %v185 = vsel %vm100, %v182, 0
    %v188 = vsel %vm100, %v183, 0
    %190 = vmatprep.subr.mxu0 0.0
    %191 = vmatpush1.msra.mxu0 %v96
    %192 = vmatprep.subr.mxu0 0.0
    %193 = vmatpush1.msra.mxu0 %v97
    %194 = vmatprep.subr.mxu0 0.0
    %195 = vmatpush1.msra.mxu0 0.0
    %196 = vmatprep.subr.mxu0 0.0
    %197 = vmatpush1.msra.mxu0 0.0
    %198 = vmatprep.subr.mxu0 0.0
    %199 = vmatpush1.msra.mxu0 0.0
    %200 = vmatprep.subr.mxu0 0.0
    %201 = vmatpush1.msra.mxu0 0.0
    %202 = vmatprep.subr.mxu0 0.0
    %203 = vmatpush1.msra.mxu0 0.0
    %204 = vmatprep.subr.mxu0 0.0
    %205 = vmatpush1.msra.mxu0 0.0
    %206 = vmatprep.subr.mxu0 0.0
    %207 = vmatpush1.msra.mxu0 0.0
    %208 = vmatprep.subr.mxu0 0.0
    %209 = vmatpush1.msra.mxu0 0.0
    %210 = vmatprep.subr.mxu0 0.0
    %211 = vmatpush1.msra.mxu0 0.0
    %212 = vmatprep.subr.mxu0 0.0
    %213 = vmatpush1.msra.mxu0 0.0
    %214 = vmatprep.subr.mxu0 0.0
    %215 = vmatpush1.msra.mxu0 0.0
    %216 = vmatprep.subr.mxu0 0.0
    %217 = vmatpush1.msra.mxu0 0.0
    %218 = vmatprep.subr.mxu0 0.0
    %219 = vmatpush1.msra.mxu0 0.0
    %220 = vmatprep.subr.mxu0 0.0
    %221 = vmatpush1.msra.mxu0 0.0
    %222 = vmatprep.subr.mxu0 0.0
    %223 = vmatpush1.msra.mxu0 0.0
    %224 = vmatprep.subr.mxu0 0.0
    %225 = vmatpush1.msra.mxu0 0.0
    %226 = vmatprep.subr.mxu0 0.0
    %227 = vmatpush1.msra.mxu0 0.0
    %228 = vmatprep.subr.mxu0 0.0
    %229 = vmatpush1.msra.mxu0 0.0
    %230 = vmatprep.subr.mxu0 0.0
    %231 = vmatpush1.msra.mxu0 0.0
    %232 = vmatprep.subr.mxu0 0.0
    %233 = vmatpush1.msra.mxu0 0.0
    %234 = vmatprep.subr.mxu0 0.0
    %235 = vmatpush1.msra.mxu0 0.0
    %236 = vmatprep.subr.mxu0 0.0
    %237 = vmatpush1.msra.mxu0 0.0
    %238 = vmatprep.subr.mxu0 0.0
    %239 = vmatpush1.msra.mxu0 0.0
    %240 = vmatprep.subr.mxu0 0.0
    %241 = vmatpush1.msra.mxu0 0.0
    %242 = vmatprep.subr.mxu0 0.0
    %243 = vmatpush1.msra.mxu0 0.0
    %244 = vmatprep.subr.mxu0 0.0
    %245 = vmatpush1.msra.mxu0 0.0
    %246 = vmatprep.subr.mxu0 0.0
    %247 = vmatpush1.msra.mxu0 0.0
    %248 = vmatprep.subr.mxu0 0.0
    %249 = vmatpush1.msra.mxu0 0.0
    %250 = vmatprep.subr.mxu0 0.0
    %251 = vmatpush1.msra.mxu0 0.0
    %252 = vmatprep.subr.mxu0 0.0
    %253 = vmatpush1.msra.mxu0 0.0
    %254 = vmatprep.mubr.f32.mxu0 0.0
    %255 = vmatmul.mubr.f32.gmra.mrb[0].mxu0 %v185
    %v256 = vpop.f32.mrb[0].mxu0
    %v257 = vadd.f32 0.0, %v256
    %v258 = vpop.f32.mrb[0].mxu0
    %259 = vmatprep.mubr.f32.mxu0 0.0
    %260 = vmatmul.mubr.f32.gmra.mrb[0].mxu0 %v188
    %v261 = vpop.f32.mrb[0].mxu0
    %v262 = vadd.f32 0.0, %v261
    %v263 = vpop.f32.mrb[0].mxu0
    %264 = vdwg.mxu0
    %v265 = vld [vmem:[#allocation7] sm:$0xff]
    %v266 = vld [vmem:[#allocation7 + $0x8] sm:$0xff]
    %v267 = vld [vmem:[#allocation7 + $0x10] sm:$0xff]
    %v268 = vld [vmem:[#allocation7 + $0x18] sm:$0xff]
    %v269 = vld [vmem:[#allocation7 + $0x20] sm:$0xff]
    %v270 = vld [vmem:[#allocation7 + $0x28] sm:$0xff]
    %v271 = vld [vmem:[#allocation7 + $0x30] sm:$0xff]
    %v272 = vld [vmem:[#allocation7 + $0x38] sm:$0xff]
    %v273 = vld [vmem:[#allocation7 + $0x40] sm:$0xff]
    %v274 = vld [vmem:[#allocation7 + $0x48] sm:$0xff]
    %v275 = vld [vmem:[#allocation7 + $0x50] sm:$0xff]
    %v276 = vld [vmem:[#allocation7 + $0x58] sm:$0xff]
    %v277 = vld [vmem:[#allocation7 + $0x60] sm:$0xff]
    %v278 = vld [vmem:[#allocation7 + $0x68] sm:$0xff]
    %v279 = vld [vmem:[#allocation7 + $0x70] sm:$0xff]
    %v280 = vld [vmem:[#allocation7 + $0x78] sm:$0xff]
    %281 = vmatprep.subr.mxu0 0.0
    %282 = vmatpush1.msra.mxu0 %v265
    %283 = vmatprep.subr.mxu0 0.0
    %284 = vmatpush1.msra.mxu0 %v266
    %285 = vmatprep.subr.mxu0 0.0
    %286 = vmatpush1.msra.mxu0 %v267
    %287 = vmatprep.subr.mxu0 0.0
    %288 = vmatpush1.msra.mxu0 %v268
    %289 = vmatprep.subr.mxu0 0.0
    %290 = vmatpush1.msra.mxu0 %v269
    %291 = vmatprep.subr.mxu0 0.0
    %292 = vmatpush1.msra.mxu0 %v270
    %293 = vmatprep.subr.mxu0 0.0
    %294 = vmatpush1.msra.mxu0 %v271
    %295 = vmatprep.subr.mxu0 0.0
    %296 = vmatpush1.msra.mxu0 %v272
    %297 = vmatprep.subr.mxu0 0.0
    %298 = vmatpush1.msra.mxu0 %v273
    %299 = vmatprep.subr.mxu0 0.0
    %300 = vmatpush1.msra.mxu0 %v274
    %301 = vmatprep.subr.mxu0 0.0
    %302 = vmatpush1.msra.mxu0 %v275
    %303 = vmatprep.subr.mxu0 0.0
    %304 = vmatpush1.msra.mxu0 %v276
    %305 = vmatprep.subr.mxu0 0.0
    %306 = vmatpush1.msra.mxu0 %v277
    %307 = vmatprep.subr.mxu0 0.0
    %308 = vmatpush1.msra.mxu0 %v278
    %309 = vmatprep.subr.mxu0 0.0
    %310 = vmatpush1.msra.mxu0 %v279
    %311 = vmatprep.subr.mxu0 0.0
    %312 = vmatpush1.msra.mxu0 %v280
    %313 = vmatprep.subr.mxu0 0.0
    %314 = vmatpush1.msra.mxu0 0.0
    %315 = vmatprep.subr.mxu0 0.0
    %316 = vmatpush1.msra.mxu0 0.0
    %317 = vmatprep.subr.mxu0 0.0
    %318 = vmatpush1.msra.mxu0 0.0
    %319 = vmatprep.subr.mxu0 0.0
    %320 = vmatpush1.msra.mxu0 0.0
    %321 = vmatprep.subr.mxu0 0.0
    %322 = vmatpush1.msra.mxu0 0.0
    %323 = vmatprep.subr.mxu0 0.0
    %324 = vmatpush1.msra.mxu0 0.0
    %325 = vmatprep.subr.mxu0 0.0
    %326 = vmatpush1.msra.mxu0 0.0
    %327 = vmatprep.subr.mxu0 0.0
    %328 = vmatpush1.msra.mxu0 0.0
    %329 = vmatprep.subr.mxu0 0.0
    %330 = vmatpush1.msra.mxu0 0.0
    %331 = vmatprep.subr.mxu0 0.0
    %332 = vmatpush1.msra.mxu0 0.0
    %333 = vmatprep.subr.mxu0 0.0
    %334 = vmatpush1.msra.mxu0 0.0
    %335 = vmatprep.subr.mxu0 0.0
    %336 = vmatpush1.msra.mxu0 0.0
    %337 = vmatprep.subr.mxu0 0.0
    %338 = vmatpush1.msra.mxu0 0.0
    %339 = vmatprep.subr.mxu0 0.0
    %340 = vmatpush1.msra.mxu0 0.0
    %341 = vmatprep.subr.mxu0 0.0
    %342 = vmatpush1.msra.mxu0 0.0
    %343 = vmatprep.subr.mxu0 0.0
    %344 = vmatpush1.msra.mxu0 0.0
    %345 = vmatprep.mubr.f32.mxu0 0.0
    %346 = vmatmul.mubr.f32.gmra.mrb[0].mxu0 %v174
    %v347 = vpop.f32.mrb[0].mxu0
    %v348 = vadd.f32 0.0, %v347
    %v349 = vpop.f32.mrb[0].mxu0
    %350 = vmatprep.mubr.f32.mxu0 0.0
    %351 = vmatmul.mubr.f32.gmra.mrb[0].mxu0 %v179
    %v352 = vpop.f32.mrb[0].mxu0
    %v353 = vadd.f32 0.0, %v352
    %v354 = vpop.f32.mrb[0].mxu0
    %355 = vdwg.mxu0
    %v356 = vld [vmem:[#allocation8] sm:$0xff]
    %v357 = vld [vmem:[#allocation8 + $0x8] sm:$0xff]
    %v358 = vld [vmem:[#allocation8 + $0x10] sm:$0xff]
    %v359 = vld [vmem:[#allocation8 + $0x18] sm:$0xff]
    %v360 = vld [vmem:[#allocation8 + $0x20] sm:$0xff]
    %v361 = vld [vmem:[#allocation8 + $0x28] sm:$0xff]
    %v362 = vld [vmem:[#allocation8 + $0x30] sm:$0xff]
    %v363 = vld [vmem:[#allocation8 + $0x38] sm:$0xff]
    %v364 = vld [vmem:[#allocation8 + $0x40] sm:$0xff]
    %v365 = vld [vmem:[#allocation8 + $0x48] sm:$0xff]
    %v366 = vld [vmem:[#allocation8 + $0x50] sm:$0xff]
    %v367 = vld [vmem:[#allocation8 + $0x58] sm:$0xff]
    %v368 = vld [vmem:[#allocation8 + $0x60] sm:$0xff]
    %v369 = vld [vmem:[#allocation8 + $0x68] sm:$0xff]
    %v370 = vld [vmem:[#allocation8 + $0x70] sm:$0xff]
    %v371 = vld [vmem:[#allocation8 + $0x78] sm:$0xff]
    %372 = vmatprep.subr.mxu0 0.0
    %373 = vmatpush1.msra.mxu0 %v356
    %374 = vmatprep.subr.mxu0 0.0
    %375 = vmatpush1.msra.mxu0 %v357
    %376 = vmatprep.subr.mxu0 0.0
    %377 = vmatpush1.msra.mxu0 %v358
    %378 = vmatprep.subr.mxu0 0.0
    %379 = vmatpush1.msra.mxu0 %v359
    %380 = vmatprep.subr.mxu0 0.0
    %381 = vmatpush1.msra.mxu0 %v360
    %382 = vmatprep.subr.mxu0 0.0
    %383 = vmatpush1.msra.mxu0 %v361
    %384 = vmatprep.subr.mxu0 0.0
    %385 = vmatpush1.msra.mxu0 %v362
    %386 = vmatprep.subr.mxu0 0.0
    %387 = vmatpush1.msra.mxu0 %v363
    %388 = vmatprep.subr.mxu0 0.0
    %389 = vmatpush1.msra.mxu0 %v364
    %390 = vmatprep.subr.mxu0 0.0
    %391 = vmatpush1.msra.mxu0 %v365
    %392 = vmatprep.subr.mxu0 0.0
    %393 = vmatpush1.msra.mxu0 %v366
    %394 = vmatprep.subr.mxu0 0.0
    %395 = vmatpush1.msra.mxu0 %v367
    %396 = vmatprep.subr.mxu0 0.0
    %397 = vmatpush1.msra.mxu0 %v368
    %398 = vmatprep.subr.mxu0 0.0
    %399 = vmatpush1.msra.mxu0 %v369
    %400 = vmatprep.subr.mxu0 0.0
    %401 = vmatpush1.msra.mxu0 %v370
    %402 = vmatprep.subr.mxu0 0.0
    %403 = vmatpush1.msra.mxu0 %v371
    %404 = vmatprep.subr.mxu0 0.0
    %405 = vmatpush1.msra.mxu0 0.0
    %406 = vmatprep.subr.mxu0 0.0
    %407 = vmatpush1.msra.mxu0 0.0
    %408 = vmatprep.subr.mxu0 0.0
    %409 = vmatpush1.msra.mxu0 0.0
    %410 = vmatprep.subr.mxu0 0.0
    %411 = vmatpush1.msra.mxu0 0.0
    %412 = vmatprep.subr.mxu0 0.0
    %413 = vmatpush1.msra.mxu0 0.0
    %414 = vmatprep.subr.mxu0 0.0
    %415 = vmatpush1.msra.mxu0 0.0
    %416 = vmatprep.subr.mxu0 0.0
    %417 = vmatpush1.msra.mxu0 0.0
    %418 = vmatprep.subr.mxu0 0.0
    %419 = vmatpush1.msra.mxu0 0.0
    %420 = vmatprep.subr.mxu0 0.0
    %421 = vmatpush1.msra.mxu0 0.0
    %422 = vmatprep.subr.mxu0 0.0
    %423 = vmatpush1.msra.mxu0 0.0
    %424 = vmatprep.subr.mxu0 0.0
    %425 = vmatpush1.msra.mxu0 0.0
    %426 = vmatprep.subr.mxu0 0.0
    %427 = vmatpush1.msra.mxu0 0.0
    %428 = vmatprep.subr.mxu0 0.0
    %429 = vmatpush1.msra.mxu0 0.0
    %430 = vmatprep.subr.mxu0 0.0
    %431 = vmatpush1.msra.mxu0 0.0
    %432 = vmatprep.subr.mxu0 0.0
    %433 = vmatpush1.msra.mxu0 0.0
    %434 = vmatprep.subr.mxu0 0.0
    %435 = vmatpush1.msra.mxu0 0.0
    %436 = vmatprep.mubr.f32.mxu0 0.0
    %437 = vmatmul.mubr.f32.gmra.mrb[0].mxu0 %v257
    %v438 = vpop.f32.mrb[0].mxu0
    %v439 = vadd.f32 0.0, %v438
    %v440 = vpop.f32.mrb[0].mxu0
    %441 = vmatprep.mubr.f32.mxu0 0.0
    %442 = vmatmul.mubr.f32.gmra.mrb[0].mxu0 %v262
    %v443 = vpop.f32.mrb[0].mxu0
    %v444 = vadd.f32 0.0, %v443
    %v445 = vpop.f32.mrb[0].mxu0
    %446 = vdwg.mxu0
    %v447 = vsub.f32 %v348, %v439
    %v448 = vsub.f32 %v353, %v444
    %449 = vmatprep.subr.mxu0 0.0
    %450 = vmatpush1.msra.mxu0 %v265
    %451 = vmatprep.subr.mxu0 0.0
    %452 = vmatpush1.msra.mxu0 %v266
    %453 = vmatprep.subr.mxu0 0.0
    %454 = vmatpush1.msra.mxu0 %v267
    %455 = vmatprep.subr.mxu0 0.0
    %456 = vmatpush1.msra.mxu0 %v268
    %457 = vmatprep.subr.mxu0 0.0
    %458 = vmatpush1.msra.mxu0 %v269
    %459 = vmatprep.subr.mxu0 0.0
    %460 = vmatpush1.msra.mxu0 %v270
    %461 = vmatprep.subr.mxu0 0.0
    %462 = vmatpush1.msra.mxu0 %v271
    %463 = vmatprep.subr.mxu0 0.0
    %464 = vmatpush1.msra.mxu0 %v272
    %465 = vmatprep.subr.mxu0 0.0
    %466 = vmatpush1.msra.mxu0 %v273
    %467 = vmatprep.subr.mxu0 0.0
    %468 = vmatpush1.msra.mxu0 %v274
    %469 = vmatprep.subr.mxu0 0.0
    %470 = vmatpush1.msra.mxu0 %v275
    %471 = vmatprep.subr.mxu0 0.0
    %472 = vmatpush1.msra.mxu0 %v276
    %473 = vmatprep.subr.mxu0 0.0
    %474 = vmatpush1.msra.mxu0 %v277
    %475 = vmatprep.subr.mxu0 0.0
    %476 = vmatpush1.msra.mxu0 %v278
    %477 = vmatprep.subr.mxu0 0.0
    %478 = vmatpush1.msra.mxu0 %v279
    %479 = vmatprep.subr.mxu0 0.0
    %480 = vmatpush1.msra.mxu0 %v280
    %481 = vmatprep.subr.mxu0 0.0
    %482 = vmatpush1.msra.mxu0 0.0
    %483 = vmatprep.subr.mxu0 0.0
    %484 = vmatpush1.msra.mxu0 0.0
    %485 = vmatprep.subr.mxu0 0.0
    %486 = vmatpush1.msra.mxu0 0.0
    %487 = vmatprep.subr.mxu0 0.0
    %488 = vmatpush1.msra.mxu0 0.0
    %489 = vmatprep.subr.mxu0 0.0
    %490 = vmatpush1.msra.mxu0 0.0
    %491 = vmatprep.subr.mxu0 0.0
    %492 = vmatpush1.msra.mxu0 0.0
    %493 = vmatprep.subr.mxu0 0.0
    %494 = vmatpush1.msra.mxu0 0.0
    %495 = vmatprep.subr.mxu0 0.0
    %496 = vmatpush1.msra.mxu0 0.0
    %497 = vmatprep.subr.mxu0 0.0
    %498 = vmatpush1.msra.mxu0 0.0
    %499 = vmatprep.subr.mxu0 0.0
    %500 = vmatpush1.msra.mxu0 0.0
    %501 = vmatprep.subr.mxu0 0.0
    %502 = vmatpush1.msra.mxu0 0.0
    %503 = vmatprep.subr.mxu0 0.0
    %504 = vmatpush1.msra.mxu0 0.0
    %505 = vmatprep.subr.mxu0 0.0
    %506 = vmatpush1.msra.mxu0 0.0
    %507 = vmatprep.subr.mxu0 0.0
    %508 = vmatpush1.msra.mxu0 0.0
    %509 = vmatprep.subr.mxu0 0.0
    %510 = vmatpush1.msra.mxu0 0.0
    %511 = vmatprep.subr.mxu0 0.0
    %512 = vmatpush1.msra.mxu0 0.0
    %513 = vmatprep.mubr.f32.mxu0 0.0
    %514 = vmatmul.mubr.f32.gmra.mrb[0].mxu0 %v257
    %v515 = vpop.f32.mrb[0].mxu0
    %v516 = vadd.f32 0.0, %v515
    %v517 = vpop.f32.mrb[0].mxu0
    %518 = vmatprep.mubr.f32.mxu0 0.0
    %519 = vmatmul.mubr.f32.gmra.mrb[0].mxu0 %v262
    %v520 = vpop.f32.mrb[0].mxu0
    %v521 = vadd.f32 0.0, %v520
    %v522 = vpop.f32.mrb[0].mxu0
    %523 = vdwg.mxu0
    %524 = vmatprep.subr.mxu0 0.0
    %525 = vmatpush1.msra.mxu0 %v356
    %526 = vmatprep.subr.mxu0 0.0
    %527 = vmatpush1.msra.mxu0 %v357
    %528 = vmatprep.subr.mxu0 0.0
    %529 = vmatpush1.msra.mxu0 %v358
    %530 = vmatprep.subr.mxu0 0.0
    %531 = vmatpush1.msra.mxu0 %v359
    %532 = vmatprep.subr.mxu0 0.0
    %533 = vmatpush1.msra.mxu0 %v360
    %534 = vmatprep.subr.mxu0 0.0
    %535 = vmatpush1.msra.mxu0 %v361
    %536 = vmatprep.subr.mxu0 0.0
    %537 = vmatpush1.msra.mxu0 %v362
    %538 = vmatprep.subr.mxu0 0.0
    %539 = vmatpush1.msra.mxu0 %v363
    %540 = vmatprep.subr.mxu0 0.0
    %541 = vmatpush1.msra.mxu0 %v364
    %542 = vmatprep.subr.mxu0 0.0
    %543 = vmatpush1.msra.mxu0 %v365
    %544 = vmatprep.subr.mxu0 0.0
    %545 = vmatpush1.msra.mxu0 %v366
    %546 = vmatprep.subr.mxu0 0.0
    %547 = vmatpush1.msra.mxu0 %v367
    %548 = vmatprep.subr.mxu0 0.0
    %549 = vmatpush1.msra.mxu0 %v368
    %550 = vmatprep.subr.mxu0 0.0
    %551 = vmatpush1.msra.mxu0 %v369
    %552 = vmatprep.subr.mxu0 0.0
    %553 = vmatpush1.msra.mxu0 %v370
    %554 = vmatprep.subr.mxu0 0.0
    %555 = vmatpush1.msra.mxu0 %v371
    %556 = vmatprep.subr.mxu0 0.0
    %557 = vmatpush1.msra.mxu0 0.0
    %558 = vmatprep.subr.mxu0 0.0
    %559 = vmatpush1.msra.mxu0 0.0
    %560 = vmatprep.subr.mxu0 0.0
    %561 = vmatpush1.msra.mxu0 0.0
    %562 = vmatprep.subr.mxu0 0.0
    %563 = vmatpush1.msra.mxu0 0.0
    %564 = vmatprep.subr.mxu0 0.0
    %565 = vmatpush1.msra.mxu0 0.0
    %566 = vmatprep.subr.mxu0 0.0
    %567 = vmatpush1.msra.mxu0 0.0
    %568 = vmatprep.subr.mxu0 0.0
    %569 = vmatpush1.msra.mxu0 0.0
    %570 = vmatprep.subr.mxu0 0.0
    %571 = vmatpush1.msra.mxu0 0.0
    %572 = vmatprep.subr.mxu0 0.0
    %573 = vmatpush1.msra.mxu0 0.0
    %574 = vmatprep.subr.mxu0 0.0
    %575 = vmatpush1.msra.mxu0 0.0
    %576 = vmatprep.subr.mxu0 0.0
    %577 = vmatpush1.msra.mxu0 0.0
    %578 = vmatprep.subr.mxu0 0.0
    %579 = vmatpush1.msra.mxu0 0.0
    %580 = vmatprep.subr.mxu0 0.0
    %581 = vmatpush1.msra.mxu0 0.0
    %582 = vmatprep.subr.mxu0 0.0
    %583 = vmatpush1.msra.mxu0 0.0
    %584 = vmatprep.subr.mxu0 0.0
    %585 = vmatpush1.msra.mxu0 0.0
    %586 = vmatprep.subr.mxu0 0.0
    %587 = vmatpush1.msra.mxu0 0.0
    %588 = vmatprep.mubr.f32.mxu0 0.0
    %589 = vmatmul.mubr.f32.gmra.mrb[0].mxu0 %v174
    %v590 = vpop.f32.mrb[0].mxu0
    %v591 = vadd.f32 %v516, %v590
    %v592 = vpop.f32.mrb[0].mxu0
    %593 = vmatprep.mubr.f32.mxu0 0.0
    %594 = vmatmul.mubr.f32.gmra.mrb[0].mxu0 %v179
    %v595 = vpop.f32.mrb[0].mxu0
    %v596 = vadd.f32 %v521, %v595
    %v597 = vpop.f32.mrb[0].mxu0
    %598 = vdwg.mxu0
    %v599 = vand.u32 2147483647, %v447
    %v600 = vand.u32 2147483647, %v448
    %v601 = vadd.f32 %v599, %v600
    %602 = vadd.xlane.f32.xlu0 %v601
    %v603 = vpop.xlane.xlu0 %602
    %v604 = vrot.slane %v603, 4
    %v605 = vadd.f32 %v603, %v604
    %v606 = vrot.slane %v605, 2
    %v607 = vadd.f32 %v605, %v606
    %v608 = vrot.slane %v607, 1
    %v609 = vadd.f32 %v607, %v608
    %s610 = vtos %v609
    %v611 = vand.u32 2147483647, %v591
    %v612 = vand.u32 2147483647, %v596
    %v613 = vadd.f32 %v611, %v612
    %614 = vadd.xlane.f32.xlu0 %v613
    %v615 = vpop.xlane.xlu0 %614
    %v616 = vrot.slane %v615, 4
    %v617 = vadd.f32 %v615, %v616
    %v618 = vrot.slane %v617, 2
    %v619 = vadd.f32 %v617, %v618
    %v620 = vrot.slane %v619, 1
    %v621 = vadd.f32 %v619, %v620
    %s622 = vtos %v621
    %s623 = sadd.f32 %s610, %s622
    %v624 = vstv %s623
    %625 = vst [vmem:[#allocation11] sm:$0x1] %v624
    // Predicated region
    $region46: #{tpu_custom_call.1} parent=1 // pred_check
      _
    $region47: #{tpu_custom_call.1} parent=1 // pred_check_branch
      %627 = sbr.rel (0) target = $region49
    $region48: #{tpu_custom_call.1} parent=1 // pred_region
      %s629 = ssub.s32 16, 16
      %630 = vsyncadd [#allocation4], %s629
      %s632 = sshll.u32 [#allocation11], 4
      %s633 = int_to_ptr.vmem [resolvable:$true] %s632
      %635 = dma.vmem_to_hbm [thread:$0]  %s633, 16, %s6, [#allocation4]
    $region49: #{tpu_custom_call.1} parent=1 // pred_fallthru
      _
    // Predicated region
    $region50: #{tpu_custom_call.1} parent=1 // pred_check
      _
    $region51: #{tpu_custom_call.1} parent=1 // pred_check_branch
      %637 = sbr.rel (0) target = $region53
    $region52: #{tpu_custom_call.1} parent=1 // pred_region
      %638 = dma.done [#allocation4], 16
    $region53: #{tpu_custom_call.1} parent=1 // pred_fallthru
      _
    %639 = vsyncpa [#allocation3], 1
    %640 = vsyncpa [#allocation6], 1
    %641 = vsyncpa [#allocation9], 1
    %642 = vsyncpa [#allocation4], 1

</llo_original>
